<compile_context>
chip_gen: v7x
topology: tpu7x:2x2x1
jax: 0.10.0
libtpu: 0.0.40
codegen_flags: <defaults>
</compile_context>

<pallas_src>
import numpy as np

import jax
import jax.numpy as jnp
from jax.experimental import pallas as pl
from jax.experimental.pallas import tpu as pltpu


def _spatial_attention_kernel(x_ref, m_avg_ref, m_max_ref, o_ref,
                              sum_acc, max_acc):
    """One (NB, CB, HW) input block per grid step; grid = (batch, channel).

    x_ref     : (NB, CB, HW) native dtype, VMEM -- input (spatial on lanes)
    m_avg_ref : (HW, HW)     f32, VMEM -- Toeplitz conv matrix, mean channel (1/C folded in)
    m_max_ref : (HW, HW)     f32, VMEM -- Toeplitz conv matrix, max channel
    o_ref     : (NB, 1, HW)  f32, VMEM -- sigmoid attention map (written on last C step)
    sum_acc   : (NB, HW)     f32 scratch -- running channel sum
    max_acc   : (NB, HW)     f32 scratch -- running channel max
    """
    c = pl.program_id(1)

    @pl.when(c == 0)
    def _init():
        sum_acc[...] = jnp.zeros_like(sum_acc)
        max_acc[...] = jnp.full_like(max_acc, -jnp.inf)

    # Channel pooling for this channel tile.  The sum accumulates in f32 via
    # the reduce dtype (no full f32 copy of the block); max stays native dtype.
    x = x_ref[...]                                              # (NB, CB, HW)
    sum_acc[...] = sum_acc[...] + jnp.sum(x, axis=1, dtype=jnp.float32)
    max_acc[...] = jnp.maximum(max_acc[...],
                               jnp.max(x, axis=1).astype(jnp.float32))

    @pl.when(c == pl.num_programs(1) - 1)
    def _finalize():
        # Whole KxK conv (zero padding included) as two MXU matmuls.  1/C of
        # the channel mean is pre-folded into m_avg, so the channel *sum* is
        # the correct left operand.
        logits = (jnp.dot(sum_acc[...], m_avg_ref[...],
                          preferred_element_type=jnp.float32)
                  + jnp.dot(max_acc[...], m_max_ref[...],
                            preferred_element_type=jnp.float32))
        o_ref[:, 0, :] = jax.nn.sigmoid(logits).astype(o_ref.dtype)


def _largest_divisor_leq(n, cap):
    best = 1
    for d in range(1, min(n, cap) + 1):
        if n % d == 0:
            best = d
    return best


def _pick_channel_block(C, cap=256):
    """Channel tile: all of C when small; otherwise the largest divisor of C
    that is a multiple of 8 (BlockSpec sublane rule) and <= cap."""
    if C <= cap:
        return C
    best = None
    for d in range(8, cap + 1, 8):
        if C % d == 0:
            best = d
    return best if best is not None else C   # rare shapes: fall back to untiled


def _conv_tap_indices(H, W, K):
    """(HW, HW) int32 map: entry [p_in, p_out] is the flat (ky, kx) weight index
    of the tap connecting input pixel p_in to output pixel p_out, or the
    sentinel K*K when that tap falls in the zero padding.  Trace-time numpy."""
    HW = H * W
    P = K // 2
    idx = np.full((HW, HW), K * K, dtype=np.int32)
    oy, ox = np.meshgrid(np.arange(H), np.arange(W), indexing="ij")
    p_out = (oy * W + ox).reshape(-1)
    for ky in range(K):
        for kx in range(K):
            iy = oy + ky - P
            ix = ox + kx - P
            valid = ((iy >= 0) & (iy < H) & (ix >= 0) & (ix < W)).reshape(-1)
            p_in = (iy * W + ix).reshape(-1)
            idx[p_in[valid], p_out[valid]] = ky * K + kx
    return idx


def spatial_attention(x, conv_w):
    """x: (N, C, H, W).  conv_w: (1, 2, K, K).  Returns (N, 1, H, W) f32."""
    N, C, H, W = x.shape
    K = conv_w.shape[-1]
    HW = H * W

    NB = _largest_divisor_leq(N, 8)   # fill f32 sublanes; don't shrink for grid steps
    CB = _pick_channel_block(C)

    # Masked-Toeplitz conv matrices (zero padding baked in, 1/C folded into the
    # mean channel).  idx is a trace-time constant; the gather keeps the build
    # jit-/grad-friendly w.r.t. conv_w.
    # TODO(synk): for very large HW (>~2K) these (HW, HW) matrices no longer fit
    # VMEM; a rolled-tap fallback path would be needed there.
    idx = _conv_tap_indices(H, W, K)
    w = conv_w.astype(jnp.float32).reshape(2, K * K)
    zero = jnp.zeros((1,), jnp.float32)
    m_avg = jnp.concatenate([w[0] * (1.0 / C), zero])[idx]        # (HW, HW)
    m_max = jnp.concatenate([w[1], zero])[idx]                    # (HW, HW)

    x_flat = x.reshape(N, C, HW)                                  # lane-dense spatial layout

    out = pl.pallas_call(
        _spatial_attention_kernel,
        out_shape=jax.ShapeDtypeStruct((N, 1, HW), jnp.float32),
        grid=(N // NB, C // CB),
        in_specs=[
            pl.BlockSpec((NB, CB, HW), lambda n, c: (n, c, 0)),
            pl.BlockSpec((HW, HW), lambda n, c: (0, 0)),          # resident, loaded once
            pl.BlockSpec((HW, HW), lambda n, c: (0, 0)),          # resident, loaded once
        ],
        out_specs=pl.BlockSpec((NB, 1, HW), lambda n, c: (n, 0, 0)),
        scratch_shapes=[
            pltpu.VMEM((NB, HW), jnp.float32),                    # channel-sum accumulator
            pltpu.VMEM((NB, HW), jnp.float32),                    # channel-max accumulator
        ],
        compiler_params=pltpu.CompilerParams(
            dimension_semantics=("parallel", "arbitrary")),
    )(x_flat, m_avg, m_max)

    return out.reshape(N, 1, H, W)


def _reference(x, conv_w):
    P = conv_w.shape[-1] // 2
    avg = jnp.mean(x, axis=1, keepdims=True)
    mx = jnp.max(x, axis=1, keepdims=True)
    pooled = jnp.concatenate([avg, mx], axis=1).astype(jnp.float32)
    y = jax.lax.conv_general_dilated(
        pooled, conv_w.astype(jnp.float32),
        window_strides=(1, 1), padding=[(P, P), (P, P)],
        dimension_numbers=("NCHW", "OIHW", "NCHW"),
        precision=jax.lax.Precision.HIGHEST)
    return jax.nn.sigmoid(y)


if __name__ == "__main__":
    key = jax.random.PRNGKey(0)
    k_x, k_w = jax.random.split(key)

    N, C, H, W = 2, 4, 16, 16
    K = 7

    x = jax.random.normal(k_x, (N, C, H, W), dtype=jnp.float32)
    # Deterministic conv weight init (kaiming-uniform-like bound, no bias).
    bound = 1.0 / np.sqrt(2 * K * K)
    conv_w = jax.random.uniform(k_w, (1, 2, K, K), dtype=jnp.float32,
                                minval=-bound, maxval=bound)

    out = jax.block_until_ready(spatial_attention(x, conv_w))
    ref = jax.block_until_ready(_reference(x, conv_w))

    assert out.shape == (N, 1, H, W)
    # Tolerance covers the MXU's default f32 matmul pass precision; exact-f32
    # matmul paths agree to ~1e-6.
    np.testing.assert_allclose(np.asarray(out), np.asarray(ref),
                               rtol=5e-3, atol=5e-3)

    print("KERNEL_OK")
</pallas_src>

<mosaic_0001>
module attributes {stable_mosaic.version = 11 : i64} {
  func.func @_spatial_attention_kernel(%arg0: i32, %arg1: i32, %arg2: memref<2x4x256xf32, #tpu.memory_space<vmem>>, %arg3: memref<256x256xf32, #tpu.memory_space<vmem>>, %arg4: memref<256x256xf32, #tpu.memory_space<vmem>>, %arg5: memref<2x1x256xf32, #tpu.memory_space<vmem>>, %arg6: memref<2x256xf32, #tpu.memory_space<vmem>>, %arg7: memref<2x256xf32, #tpu.memory_space<vmem>>) attributes {dimension_semantics = [#tpu.dimension_semantics<parallel>, #tpu.dimension_semantics<arbitrary>], iteration_bounds = array<i64: 1, 1>, scalar_prefetch = 0 : i64, scratch_operands = 2 : i64, tpu.core_type = #tpu.core_type<tc>, window_params = [{transform_indices = @transform_0, window_bounds = array<i64: 2, 4, 256>}, {pipeline_mode = #tpu.pipeline_mode<synchronous>, transform_indices = @transform_1, window_bounds = array<i64: 256, 256>}, {pipeline_mode = #tpu.pipeline_mode<synchronous>, transform_indices = @transform_2, window_bounds = array<i64: 256, 256>}, {transform_indices = @transform_3, window_bounds = array<i64: 2, 1, 256>}]} {
    %c0_i32 = arith.constant 0 : i32
    %0 = arith.cmpi eq, %arg1, %c0_i32 : i32
    %1 = arith.extui %0 : i1 to i32
    %c0_i32_0 = arith.constant 0 : i32
    %2 = arith.cmpi ne, %1, %c0_i32_0 : i32
    scf.if %2 {
      %cst_14 = arith.constant 0.000000e+00 : f32
      %15 = vector.broadcast %cst_14 : f32 to vector<2x256xf32>
      %c0_15 = arith.constant 0 : index
      %c0_16 = arith.constant 0 : index
      %16 = vector.load %arg6[%c0_15, %c0_16] : memref<2x256xf32, #tpu.memory_space<vmem>>, vector<2x256xf32>
      tpu.vector_store %arg6[%c0_15, %c0_16], %15 {strides = array<i32>} : memref<2x256xf32, #tpu.memory_space<vmem>>, vector<2x256xf32>,
      %cst_17 = arith.constant 0xFF800000 : f32
      %17 = vector.broadcast %cst_17 : f32 to vector<2x256xf32>
      %c0_18 = arith.constant 0 : index
      %c0_19 = arith.constant 0 : index
      %18 = vector.load %arg7[%c0_18, %c0_19] : memref<2x256xf32, #tpu.memory_space<vmem>>, vector<2x256xf32>
      tpu.vector_store %arg7[%c0_18, %c0_19], %17 {strides = array<i32>} : memref<2x256xf32, #tpu.memory_space<vmem>>, vector<2x256xf32>,
    } else {
    }
    %c0 = arith.constant 0 : index
    %c0_1 = arith.constant 0 : index
    %c0_2 = arith.constant 0 : index
    %3 = vector.load %arg2[%c0, %c0_1, %c0_2] : memref<2x4x256xf32, #tpu.memory_space<vmem>>, vector<2x4x256xf32>
    %c0_3 = arith.constant 0 : index
    %c0_4 = arith.constant 0 : index
    %4 = vector.load %arg6[%c0_3, %c0_4] : memref<2x256xf32, #tpu.memory_space<vmem>>, vector<2x256xf32>
    %cst = arith.constant dense<0.000000e+00> : vector<2x256xf32>
    %5 = vector.multi_reduction <add>, %3, %cst [1] : vector<2x4x256xf32> to vector<2x256xf32>
    %6 = arith.addf %4, %5 : vector<2x256xf32>
    %c0_5 = arith.constant 0 : index
    %c0_6 = arith.constant 0 : index
    %7 = vector.load %arg6[%c0_5, %c0_6] : memref<2x256xf32, #tpu.memory_space<vmem>>, vector<2x256xf32>
    tpu.vector_store %arg6[%c0_5, %c0_6], %6 {strides = array<i32>} : memref<2x256xf32, #tpu.memory_space<vmem>>, vector<2x256xf32>,
    %c0_7 = arith.constant 0 : index
    %c0_8 = arith.constant 0 : index
    %8 = vector.load %arg7[%c0_7, %c0_8] : memref<2x256xf32, #tpu.memory_space<vmem>>, vector<2x256xf32>
    %cst_9 = arith.constant dense<0xFF800000> : vector<2x256xf32>
    %9 = vector.multi_reduction <maximumf>, %3, %cst_9 [1] : vector<2x4x256xf32> to vector<2x256xf32>
    %10 = arith.maximumf %8, %9 : vector<2x256xf32>
    %c0_10 = arith.constant 0 : index
    %c0_11 = arith.constant 0 : index
    %11 = vector.load %arg7[%c0_10, %c0_11] : memref<2x256xf32, #tpu.memory_space<vmem>>, vector<2x256xf32>
    tpu.vector_store %arg7[%c0_10, %c0_11], %10 {strides = array<i32>} : memref<2x256xf32, #tpu.memory_space<vmem>>, vector<2x256xf32>,
    %c0_i32_12 = arith.constant 0 : i32
    %12 = arith.cmpi eq, %arg1, %c0_i32_12 : i32
    %13 = arith.extui %12 : i1 to i32
    %c0_i32_13 = arith.constant 0 : i32
    %14 = arith.cmpi ne, %13, %c0_i32_13 : i32
    scf.if %14 {
      %c0_14 = arith.constant 0 : index
      %c0_15 = arith.constant 0 : index
      %15 = vector.load %arg6[%c0_14, %c0_15] : memref<2x256xf32, #tpu.memory_space<vmem>>, vector<2x256xf32>
      %c0_16 = arith.constant 0 : index
      %c0_17 = arith.constant 0 : index
      %16 = vector.load %arg3[%c0_16, %c0_17] : memref<256x256xf32, #tpu.memory_space<vmem>>, vector<256x256xf32>
      %cst_18 = arith.constant dense<0.000000e+00> : vector<2x256xf32>
      %17 = tpu.matmul %15, %16, %cst_18 {dimension_numbers = #tpu.dot_dimension_numbers<[1], [0], [0], [1], [0, 0, 1, 1], [], []>} : vector<2x256xf32>, vector<256x256xf32>, vector<2x256xf32> -> vector<2x256xf32>
      %c0_19 = arith.constant 0 : index
      %c0_20 = arith.constant 0 : index
      %18 = vector.load %arg7[%c0_19, %c0_20] : memref<2x256xf32, #tpu.memory_space<vmem>>, vector<2x256xf32>
      %c0_21 = arith.constant 0 : index
      %c0_22 = arith.constant 0 : index
      %19 = vector.load %arg4[%c0_21, %c0_22] : memref<256x256xf32, #tpu.memory_space<vmem>>, vector<256x256xf32>
      %cst_23 = arith.constant dense<0.000000e+00> : vector<2x256xf32>
      %20 = tpu.matmul %18, %19, %cst_23 {dimension_numbers = #tpu.dot_dimension_numbers<[1], [0], [0], [1], [0, 0, 1, 1], [], []>} : vector<2x256xf32>, vector<256x256xf32>, vector<2x256xf32> -> vector<2x256xf32>
      %21 = arith.addf %17, %20 : vector<2x256xf32>
      %22 = arith.negf %21 : vector<2x256xf32>
      %23 = math.exp %22 : vector<2x256xf32>
      %cst_24 = arith.constant 1.000000e+00 : f32
      %24 = vector.broadcast %cst_24 : f32 to vector<2x256xf32>
      %25 = arith.addf %24, %23 : vector<2x256xf32>
      %26 = arith.divf %24, %25 : vector<2x256xf32>
      %c0_25 = arith.constant 0 : index
      %c0_26 = arith.constant 0 : index
      %c0_27 = arith.constant 0 : index
      %27 = vector.load %arg5[%c0_25, %c0_26, %c0_27] : memref<2x1x256xf32, #tpu.memory_space<vmem>>, vector<2x1x256xf32>
      %28 = vector.shape_cast %27 : vector<2x1x256xf32> to vector<2x256xf32>
      %29 = vector.shape_cast %26 : vector<2x256xf32> to vector<2x1x256xf32>
      tpu.vector_store %arg5[%c0_25, %c0_26, %c0_27], %29 {strides = array<i32>} : memref<2x1x256xf32, #tpu.memory_space<vmem>>, vector<2x1x256xf32>,
    } else {
    }
    return
  }
  func.func @transform_0(%arg0: i32, %arg1: i32) -> (i32, i32, i32) {
    %c0_i32 = arith.constant 0 : i32
    %c0_i32_0 = arith.constant 0 : i32
    return %arg0, %arg1, %c0_i32 : i32, i32, i32
  }
  func.func @transform_1(%arg0: i32, %arg1: i32) -> (i32, i32) {
    %c0_i32 = arith.constant 0 : i32
    %c0_i32_0 = arith.constant 0 : i32
    %c0_i32_1 = arith.constant 0 : i32
    return %c0_i32, %c0_i32_0 : i32, i32
  }
  func.func @transform_2(%arg0: i32, %arg1: i32) -> (i32, i32) {
    %c0_i32 = arith.constant 0 : i32
    %c0_i32_0 = arith.constant 0 : i32
    %c0_i32_1 = arith.constant 0 : i32
    return %c0_i32, %c0_i32_0 : i32, i32
  }
  func.func @transform_3(%arg0: i32, %arg1: i32) -> (i32, i32, i32) {
    %c0_i32 = arith.constant 0 : i32
    %c0_i32_0 = arith.constant 0 : i32
    %c0_i32_1 = arith.constant 0 : i32
    return %arg0, %c0_i32, %c0_i32_0 : i32, i32, i32
  }
}

</mosaic_0001>

<llo_original>
// kernel: tpu_custom_call.1
$region0: #{tpu_custom_call.1}
  #allocation0 [shape = 'u32[]', space=smem, size = 0x4, offset = 0x4, fixed_abs, tag = 'smem constant byte address 0x4 - core index']
  #allocation1 [shape = 'u32[144,128]{1,0:T(1,128)}', space=vmem, size = 0x12000, scoped, tag = 'internal scratch']
  #allocation2 [shape = 'f32[2,256]{1,0:T(2,128)}', space=vmem, size = 0x800, scoped, tag = 'scratch operand']
  #allocation3 [shape = 'f32[2,256]{1,0:T(2,128)}', space=vmem, size = 0x800, scoped, tag = 'scratch operand']
  %s0 = inlined_call_operand.hbm [shape: f32[2,4,256], index: 0, kind: input, shape index: {}]
  %s1 = inlined_call_operand.hbm [shape: f32[256,256], index: 1, kind: input, shape index: {}]
  %s2 = inlined_call_operand.hbm [shape: f32[256,256], index: 2, kind: input, shape index: {}]
  %s3 = inlined_call_operand.hbm [shape: f32[2,1,256], index: 3, kind: output, shape index: {}]
  %s4 = sld [smem:[#allocation0]]
  $region42: #{tpu_custom_call.1} parent=0
    _
  %s6 = ssub.s32 1, %s4
  %s7 = scalar_select 0, %s6, %s4
  $region1: #{tpu_custom_call.1} parent=0
    #allocation4 [shape = 'u8[8192]{0}', space=vmem, size = 0x2000, scoped, tag = 'input window, operand 0, single buffered']
    #allocation5 [shape = 's32[1]{0}', space=sflag, size = 0x4, scoped, tag = 'scoped memory for tpu_custom_call.1']
    #allocation6 [shape = 's32[1]{0}', space=sflag, size = 0x4, scoped, tag = 'scoped memory for tpu_custom_call.1']
    #allocation7 [shape = 'u8[262144]{0}', space=vmem, size = 0x40000, scoped, tag = 'input window, operand 1, single buffered']
    #allocation8 [shape = 's32[1]{0}', space=sflag, size = 0x4, scoped, tag = 'scoped memory for tpu_custom_call.1']
    #allocation9 [shape = 'u8[262144]{0}', space=vmem, size = 0x40000, scoped, tag = 'input window, operand 2, single buffered']
    #allocation10 [shape = 'u8[2048]{0}', space=vmem, size = 0x800, scoped, tag = 'output window, operand 0, single buffered']
    %8 = vsyncpa [#allocation5], 0
    %9 = vsyncpa [#allocation8], 0
    %10 = vsyncpa [#allocation6], 0
    // Predicated region
    $region2: #{tpu_custom_call.1} parent=1 // pred_check
      _
    $region3: #{tpu_custom_call.1} parent=1 // pred_check_branch
      %12 = sbr.rel (0) target = $region5
    $region4: #{tpu_custom_call.1} parent=1 // pred_region
      %s14 = ssub.s32 256, 256
      %15 = vsyncadd [#allocation5], %s14
      %s16 = sshll.u32 [#allocation4], 4
      %s17 = int_to_ptr.vmem [resolvable:$true] %s16
      %22 = dma.hbm_to_vmem [thread:$0]  %s0, 256, %s17, [#allocation5], 128, 128, 8
    $region5: #{tpu_custom_call.1} parent=1 // pred_fallthru
      _
    // Predicated region
    $region6: #{tpu_custom_call.1} parent=1 // pred_check
      _
    $region7: #{tpu_custom_call.1} parent=1 // pred_check_branch
      %24 = sbr.rel (0) target = $region9
    $region8: #{tpu_custom_call.1} parent=1 // pred_region
      %s26 = ssub.s32 8192, 8192
      %27 = vsyncadd [#allocation8], %s26
      %s28 = sshll.u32 [#allocation7], 4
      %s29 = int_to_ptr.vmem [resolvable:$true] %s28
      %34 = dma.hbm_to_vmem [thread:$0]  %s1, 8192, %s29, [#allocation8], 256, 256, 16
    $region9: #{tpu_custom_call.1} parent=1 // pred_fallthru
      _
    // Predicated region
    $region10: #{tpu_custom_call.1} parent=1 // pred_check
      _
    $region11: #{tpu_custom_call.1} parent=1 // pred_check_branch
      %36 = sbr.rel (0) target = $region13
    $region12: #{tpu_custom_call.1} parent=1 // pred_region
      %s38 = ssub.s32 8192, 8192
      %39 = vsyncadd [#allocation8], %s38
      %s40 = sshll.u32 [#allocation9], 4
      %s41 = int_to_ptr.vmem [resolvable:$true] %s40
      %46 = dma.hbm_to_vmem [thread:$0]  %s2, 8192, %s41, [#allocation8], 256, 256, 16
    $region13: #{tpu_custom_call.1} parent=1 // pred_fallthru
      _
    // Predicated region
    $region14: #{tpu_custom_call.1} parent=1 // pred_check
      _
    $region15: #{tpu_custom_call.1} parent=1 // pred_check_branch
      %48 = sbr.rel (0) target = $region17
    $region16: #{tpu_custom_call.1} parent=1 // pred_region
      %49 = dma.done [#allocation5], 256
    $region17: #{tpu_custom_call.1} parent=1 // pred_fallthru
      _
    // Predicated region
    $region18: #{tpu_custom_call.1} parent=1 // pred_check
      _
    $region19: #{tpu_custom_call.1} parent=1 // pred_check_branch
      %51 = sbr.rel (0) target = $region21
    $region20: #{tpu_custom_call.1} parent=1 // pred_region
      %52 = dma.done [#allocation8], 8192
    $region21: #{tpu_custom_call.1} parent=1 // pred_fallthru
      _
    // Predicated region
    $region22: #{tpu_custom_call.1} parent=1 // pred_check
      _
    $region23: #{tpu_custom_call.1} parent=1 // pred_check_branch
      %54 = sbr.rel (0) target = $region25
    $region24: #{tpu_custom_call.1} parent=1 // pred_region
      %55 = dma.done [#allocation8], 8192
    $region25: #{tpu_custom_call.1} parent=1 // pred_fallthru
      _
    %p56 = scmp.eq.s32.totalorder 0, 0
    // Predicated region
    $region26: #{tpu_custom_call.1} parent=1 // pred_check
      %p57 = pneg %p56
    $region27: #{tpu_custom_call.1} parent=1 // pred_check_branch
      %59 = sbr.rel (%p57) target = $region29
    $region28: #{tpu_custom_call.1} parent=1 // pred_region
      %60 = vst [vmem:[#allocation2] sm:$0xf] 0.0
      %61 = vst [vmem:[#allocation3] sm:$0xf] -inf
    $region29: #{tpu_custom_call.1} parent=1 // pred_fallthru
      _
    %v62 = vld [vmem:[#allocation4] sm:$0xff]
    %v63 = vld [vmem:[#allocation4 + $0x8] sm:$0xff]
    %v64 = vld [vmem:[#allocation2] sm:$0xf]
    %v67 = vcombine.high %v62, %v62
    %v68 = vcombine.high %v63, %v63
    %vm71 = vcmask 1043456
    %v72 = vsel %vm71, %v62, 0.0
    %v73 = vrot.slane %v72, 4
    %v74 = vadd.f32 %v72, %v73
    %v75 = vrot.slane %v74, 2
    %v76 = vadd.f32 %v74, %v75
    %v77 = vrot.slane %v76, 1
    %v78 = vadd.f32 %v76, %v77
    %v79 = vsel %vm71, %v67, 0.0
    %v80 = vrot.slane %v79, 4
    %v81 = vadd.f32 %v79, %v80
    %v82 = vrot.slane %v81, 2
    %v83 = vadd.f32 %v81, %v82
    %v84 = vrot.slane %v83, 1
    %v85 = vadd.f32 %v83, %v84
    %v86 = vsel %vm71, %v63, 0.0
    %v87 = vrot.slane %v86, 4
    %v88 = vadd.f32 %v86, %v87
    %v89 = vrot.slane %v88, 2
    %v90 = vadd.f32 %v88, %v89
    %v91 = vrot.slane %v90, 1
    %v92 = vadd.f32 %v90, %v91
    %v93 = vsel %vm71, %v68, 0.0
    %v94 = vrot.slane %v93, 4
    %v95 = vadd.f32 %v93, %v94
    %v96 = vrot.slane %v95, 2
    %v97 = vadd.f32 %v95, %v96
    %v98 = vrot.slane %v97, 1
    %v99 = vadd.f32 %v97, %v98
    %v104 = vcombine.low %v78, %v85
    %v106 = vunpack.c.l.s4 1983009808
    %v107 = vunpack.c.0.s8 %v106
    %v108 = vlaneseq
    %v109 = vshrl.u32 %v108, 7
    %v110 = vsub.s32 %v107, %v109
    %v111 = vrot.slane %v104, %v110
    %v112 = vcombine.low %v92, %v99
    %v114 = vunpack.c.l.s4 1983009808
    %v115 = vunpack.c.0.s8 %v114
    %v116 = vlaneseq
    %v117 = vshrl.u32 %v116, 7
    %v118 = vsub.s32 %v115, %v117
    %v119 = vrot.slane %v112, %v118
    %vm120 = vcmask 1044484
    %v121 = vsel %vm120, %v111, %v111
    %vm122 = vcmask 1046534
    %v123 = vsel %vm122, %v111, %v121
    %v124 = vrot.slane %v119, 7
    %vm125 = vcmask 1041409
    %v126 = vsel %vm125, %v124, %v123
    %vm127 = vcmask 1043459
    %v128 = vsel %vm127, %v124, %v126
    %vm129 = vcmask 1045509
    %v130 = vsel %vm129, %v124, %v128
    %vm131 = vcmask 1047559
    %v132 = vsel %vm131, %v124, %v130
    %v134 = vadd.f32 %v64, %v132
    %135 = vst [vmem:[#allocation2] sm:$0xf] %v134
    %v136 = vld [vmem:[#allocation3] sm:$0xf]
    %v137 = vsel %vm71, %v62, -inf
    %v138 = vrot.slane %v137, 4
    %v139 = vmax.f32 %v137, %v138
    %v140 = vrot.slane %v139, 2
    %v141 = vmax.f32 %v139, %v140
    %v142 = vrot.slane %v141, 1
    %v143 = vmax.f32 %v141, %v142
    %v144 = vsel %vm71, %v67, -inf
    %v145 = vrot.slane %v144, 4
    %v146 = vmax.f32 %v144, %v145
    %v147 = vrot.slane %v146, 2
    %v148 = vmax.f32 %v146, %v147
    %v149 = vrot.slane %v148, 1
    %v150 = vmax.f32 %v148, %v149
    %v151 = vsel %vm71, %v63, -inf
    %v152 = vrot.slane %v151, 4
    %v153 = vmax.f32 %v151, %v152
    %v154 = vrot.slane %v153, 2
    %v155 = vmax.f32 %v153, %v154
    %v156 = vrot.slane %v155, 1
    %v157 = vmax.f32 %v155, %v156
    %v158 = vsel %vm71, %v68, -inf
    %v159 = vrot.slane %v158, 4
    %v160 = vmax.f32 %v158, %v159
    %v161 = vrot.slane %v160, 2
    %v162 = vmax.f32 %v160, %v161
    %v163 = vrot.slane %v162, 1
    %v164 = vmax.f32 %v162, %v163
    %v169 = vcombine.low %v143, %v150
    %v171 = vunpack.c.l.s4 1983009808
    %v172 = vunpack.c.0.s8 %v171
    %v173 = vlaneseq
    %v174 = vshrl.u32 %v173, 7
    %v175 = vsub.s32 %v172, %v174
    %v176 = vrot.slane %v169, %v175
    %v177 = vcombine.low %v157, %v164
    %v179 = vunpack.c.l.s4 1983009808
    %v180 = vunpack.c.0.s8 %v179
    %v181 = vlaneseq
    %v182 = vshrl.u32 %v181, 7
    %v183 = vsub.s32 %v180, %v182
    %v184 = vrot.slane %v177, %v183
    %v185 = vsel %vm120, %v176, %v176
    %v186 = vsel %vm122, %v176, %v185
    %v187 = vrot.slane %v184, 7
    %v188 = vsel %vm125, %v187, %v186
    %v189 = vsel %vm127, %v187, %v188
    %v190 = vsel %vm129, %v187, %v189
    %v191 = vsel %vm131, %v187, %v190
    %v193 = vmax.f32 %v136, %v191
    %194 = vst [vmem:[#allocation3] sm:$0xf] %v193
    // Predicated region
    $region30: #{tpu_custom_call.1} parent=1 // pred_check
      %p195 = pneg %p56
    $region31: #{tpu_custom_call.1} parent=1 // pred_check_branch
      %197 = sbr.rel (%p195) target = $region33
    $region32: #{tpu_custom_call.1} parent=1 // pred_region
      %v198 = vld [vmem:[#allocation2] sm:$0xf]
      %v199 = vld [vmem:[#allocation7] sm:$0xff]
      %v200 = vld [vmem:[#allocation7 + $0x8] sm:$0xff]
      %v201 = vld [vmem:[#allocation7 + $0x10] sm:$0xff]
      %v202 = vld [vmem:[#allocation7 + $0x18] sm:$0xff]
      %v203 = vld [vmem:[#allocation7 + $0x20] sm:$0xff]
      %v204 = vld [vmem:[#allocation7 + $0x28] sm:$0xff]
      %v205 = vld [vmem:[#allocation7 + $0x30] sm:$0xff]
      %v206 = vld [vmem:[#allocation7 + $0x38] sm:$0xff]
      %v207 = vld [vmem:[#allocation7 + $0x40] sm:$0xff]
      %v208 = vld [vmem:[#allocation7 + $0x48] sm:$0xff]
      %v209 = vld [vmem:[#allocation7 + $0x50] sm:$0xff]
      %v210 = vld [vmem:[#allocation7 + $0x58] sm:$0xff]
      %v211 = vld [vmem:[#allocation7 + $0x60] sm:$0xff]
      %v212 = vld [vmem:[#allocation7 + $0x68] sm:$0xff]
      %v213 = vld [vmem:[#allocation7 + $0x70] sm:$0xff]
      %v214 = vld [vmem:[#allocation7 + $0x78] sm:$0xff]
      %v215 = vld [vmem:[#allocation7 + $0x80] sm:$0xff]
      %v216 = vld [vmem:[#allocation7 + $0x88] sm:$0xff]
      %v217 = vld [vmem:[#allocation7 + $0x90] sm:$0xff]
      %v218 = vld [vmem:[#allocation7 + $0x98] sm:$0xff]
      %v219 = vld [vmem:[#allocation7 + $0xa0] sm:$0xff]
      %v220 = vld [vmem:[#allocation7 + $0xa8] sm:$0xff]
      %v221 = vld [vmem:[#allocation7 + $0xb0] sm:$0xff]
      %v222 = vld [vmem:[#allocation7 + $0xb8] sm:$0xff]
      %v223 = vld [vmem:[#allocation7 + $0xc0] sm:$0xff]
      %v224 = vld [vmem:[#allocation7 + $0xc8] sm:$0xff]
      %v225 = vld [vmem:[#allocation7 + $0xd0] sm:$0xff]
      %v226 = vld [vmem:[#allocation7 + $0xd8] sm:$0xff]
      %v227 = vld [vmem:[#allocation7 + $0xe0] sm:$0xff]
      %v228 = vld [vmem:[#allocation7 + $0xe8] sm:$0xff]
      %v229 = vld [vmem:[#allocation7 + $0xf0] sm:$0xff]
      %v230 = vld [vmem:[#allocation7 + $0xf8] sm:$0xff]
      %v231 = vld [vmem:[#allocation7 + $0x100] sm:$0xff]
      %v232 = vld [vmem:[#allocation7 + $0x108] sm:$0xff]
      %v233 = vld [vmem:[#allocation7 + $0x110] sm:$0xff]
      %v234 = vld [vmem:[#allocation7 + $0x118] sm:$0xff]
      %v235 = vld [vmem:[#allocation7 + $0x120] sm:$0xff]
      %v236 = vld [vmem:[#allocation7 + $0x128] sm:$0xff]
      %v237 = vld [vmem:[#allocation7 + $0x130] sm:$0xff]
      %v238 = vld [vmem:[#allocation7 + $0x138] sm:$0xff]
      %v239 = vld [vmem:[#allocation7 + $0x140] sm:$0xff]
      %v240 = vld [vmem:[#allocation7 + $0x148] sm:$0xff]
      %v241 = vld [vmem:[#allocation7 + $0x150] sm:$0xff]
      %v242 = vld [vmem:[#allocation7 + $0x158] sm:$0xff]
      %v243 = vld [vmem:[#allocation7 + $0x160] sm:$0xff]
      %v244 = vld [vmem:[#allocation7 + $0x168] sm:$0xff]
      %v245 = vld [vmem:[#allocation7 + $0x170] sm:$0xff]
      %v246 = vld [vmem:[#allocation7 + $0x178] sm:$0xff]
      %v247 = vld [vmem:[#allocation7 + $0x180] sm:$0xff]
      %v248 = vld [vmem:[#allocation7 + $0x188] sm:$0xff]
      %v249 = vld [vmem:[#allocation7 + $0x190] sm:$0xff]
      %v250 = vld [vmem:[#allocation7 + $0x198] sm:$0xff]
      %v251 = vld [vmem:[#allocation7 + $0x1a0] sm:$0xff]
      %v252 = vld [vmem:[#allocation7 + $0x1a8] sm:$0xff]
      %v253 = vld [vmem:[#allocation7 + $0x1b0] sm:$0xff]
      %v254 = vld [vmem:[#allocation7 + $0x1b8] sm:$0xff]
      %v255 = vld [vmem:[#allocation7 + $0x1c0] sm:$0xff]
      %v256 = vld [vmem:[#allocation7 + $0x1c8] sm:$0xff]
      %v257 = vld [vmem:[#allocation7 + $0x1d0] sm:$0xff]
      %v258 = vld [vmem:[#allocation7 + $0x1d8] sm:$0xff]
      %v259 = vld [vmem:[#allocation7 + $0x1e0] sm:$0xff]
      %v260 = vld [vmem:[#allocation7 + $0x1e8] sm:$0xff]
      %v261 = vld [vmem:[#allocation7 + $0x1f0] sm:$0xff]
      %v262 = vld [vmem:[#allocation7 + $0x1f8] sm:$0xff]
      %v263 = vld [vmem:[#allocation3] sm:$0xf]
      %v264 = vld [vmem:[#allocation9] sm:$0xff]
      %v265 = vld [vmem:[#allocation9 + $0x8] sm:$0xff]
      %v266 = vld [vmem:[#allocation9 + $0x10] sm:$0xff]
      %v267 = vld [vmem:[#allocation9 + $0x18] sm:$0xff]
      %v268 = vld [vmem:[#allocation9 + $0x20] sm:$0xff]
      %v269 = vld [vmem:[#allocation9 + $0x28] sm:$0xff]
      %v270 = vld [vmem:[#allocation9 + $0x30] sm:$0xff]
      %v271 = vld [vmem:[#allocation9 + $0x38] sm:$0xff]
      %v272 = vld [vmem:[#allocation9 + $0x40] sm:$0xff]
      %v273 = vld [vmem:[#allocation9 + $0x48] sm:$0xff]
      %v274 = vld [vmem:[#allocation9 + $0x50] sm:$0xff]
      %v275 = vld [vmem:[#allocation9 + $0x58] sm:$0xff]
      %v276 = vld [vmem:[#allocation9 + $0x60] sm:$0xff]
      %v277 = vld [vmem:[#allocation9 + $0x68] sm:$0xff]
      %v278 = vld [vmem:[#allocation9 + $0x70] sm:$0xff]
      %v279 = vld [vmem:[#allocation9 + $0x78] sm:$0xff]
      %v280 = vld [vmem:[#allocation9 + $0x80] sm:$0xff]
      %v281 = vld [vmem:[#allocation9 + $0x88] sm:$0xff]
      %v282 = vld [vmem:[#allocation9 + $0x90] sm:$0xff]
      %v283 = vld [vmem:[#allocation9 + $0x98] sm:$0xff]
      %v284 = vld [vmem:[#allocation9 + $0xa0] sm:$0xff]
      %v285 = vld [vmem:[#allocation9 + $0xa8] sm:$0xff]
      %v286 = vld [vmem:[#allocation9 + $0xb0] sm:$0xff]
      %v287 = vld [vmem:[#allocation9 + $0xb8] sm:$0xff]
      %v288 = vld [vmem:[#allocation9 + $0xc0] sm:$0xff]
      %v289 = vld [vmem:[#allocation9 + $0xc8] sm:$0xff]
      %v290 = vld [vmem:[#allocation9 + $0xd0] sm:$0xff]
      %v291 = vld [vmem:[#allocation9 + $0xd8] sm:$0xff]
      %v292 = vld [vmem:[#allocation9 + $0xe0] sm:$0xff]
      %v293 = vld [vmem:[#allocation9 + $0xe8] sm:$0xff]
      %v294 = vld [vmem:[#allocation9 + $0xf0] sm:$0xff]
      %v295 = vld [vmem:[#allocation9 + $0xf8] sm:$0xff]
      %v296 = vld [vmem:[#allocation9 + $0x100] sm:$0xff]
      %v297 = vld [vmem:[#allocation9 + $0x108] sm:$0xff]
      %v298 = vld [vmem:[#allocation9 + $0x110] sm:$0xff]
      %v299 = vld [vmem:[#allocation9 + $0x118] sm:$0xff]
      %v300 = vld [vmem:[#allocation9 + $0x120] sm:$0xff]
      %v301 = vld [vmem:[#allocation9 + $0x128] sm:$0xff]
      %v302 = vld [vmem:[#allocation9 + $0x130] sm:$0xff]
      %v303 = vld [vmem:[#allocation9 + $0x138] sm:$0xff]
      %v304 = vld [vmem:[#allocation9 + $0x140] sm:$0xff]
      %v305 = vld [vmem:[#allocation9 + $0x148] sm:$0xff]
      %v306 = vld [vmem:[#allocation9 + $0x150] sm:$0xff]
      %v307 = vld [vmem:[#allocation9 + $0x158] sm:$0xff]
      %v308 = vld [vmem:[#allocation9 + $0x160] sm:$0xff]
      %v309 = vld [vmem:[#allocation9 + $0x168] sm:$0xff]
      %v310 = vld [vmem:[#allocation9 + $0x170] sm:$0xff]
      %v311 = vld [vmem:[#allocation9 + $0x178] sm:$0xff]
      %v312 = vld [vmem:[#allocation9 + $0x180] sm:$0xff]
      %v313 = vld [vmem:[#allocation9 + $0x188] sm:$0xff]
      %v314 = vld [vmem:[#allocation9 + $0x190] sm:$0xff]
      %v315 = vld [vmem:[#allocation9 + $0x198] sm:$0xff]
      %v316 = vld [vmem:[#allocation9 + $0x1a0] sm:$0xff]
      %v317 = vld [vmem:[#allocation9 + $0x1a8] sm:$0xff]
      %v318 = vld [vmem:[#allocation9 + $0x1b0] sm:$0xff]
      %v319 = vld [vmem:[#allocation9 + $0x1b8] sm:$0xff]
      %v320 = vld [vmem:[#allocation9 + $0x1c0] sm:$0xff]
      %v321 = vld [vmem:[#allocation9 + $0x1c8] sm:$0xff]
      %v322 = vld [vmem:[#allocation9 + $0x1d0] sm:$0xff]
      %v323 = vld [vmem:[#allocation9 + $0x1d8] sm:$0xff]
      %v324 = vld [vmem:[#allocation9 + $0x1e0] sm:$0xff]
      %v325 = vld [vmem:[#allocation9 + $0x1e8] sm:$0xff]
      %v326 = vld [vmem:[#allocation9 + $0x1f0] sm:$0xff]
      %v327 = vld [vmem:[#allocation9 + $0x1f8] sm:$0xff]
      %v330 = vunpack.c.l.s4 1983009808
      %v331 = vunpack.c.0.s8 %v330
      %v332 = vlaneseq
      %v333 = vshrl.u32 %v332, 7
      %v334 = vsub.s32 %v331, %v333
      %v335 = vrot.slane %v263, %v334
      %v336 = vcombine.high %v335, %v335
      %339 = vmatprep.subr.mxu0 %v265
      %340 = vmatpush1.msra.mxu0 %v264
      %341 = vmatprep.subr.mxu0 %v267
      %342 = vmatpush1.msra.mxu0 %v266
      %343 = vmatprep.subr.mxu0 %v269
      %344 = vmatpush1.msra.mxu0 %v268
      %345 = vmatprep.subr.mxu0 %v271
      %346 = vmatpush1.msra.mxu0 %v270
      %347 = vmatprep.subr.mxu0 %v273
      %348 = vmatpush1.msra.mxu0 %v272
      %349 = vmatprep.subr.mxu0 %v275
      %350 = vmatpush1.msra.mxu0 %v274
      %351 = vmatprep.subr.mxu0 %v277
      %352 = vmatpush1.msra.mxu0 %v276
      %353 = vmatprep.subr.mxu0 %v279
      %354 = vmatpush1.msra.mxu0 %v278
      %355 = vmatprep.subr.mxu0 %v281
      %356 = vmatpush1.msra.mxu0 %v280
      %357 = vmatprep.subr.mxu0 %v283
      %358 = vmatpush1.msra.mxu0 %v282
      %359 = vmatprep.subr.mxu0 %v285
      %360 = vmatpush1.msra.mxu0 %v284
      %361 = vmatprep.subr.mxu0 %v287
      %362 = vmatpush1.msra.mxu0 %v286
      %363 = vmatprep.subr.mxu0 %v289
      %364 = vmatpush1.msra.mxu0 %v288
      %365 = vmatprep.subr.mxu0 %v291
      %366 = vmatpush1.msra.mxu0 %v290
      %367 = vmatprep.subr.mxu0 %v293
      %368 = vmatpush1.msra.mxu0 %v292
      %369 = vmatprep.subr.mxu0 %v295
      %370 = vmatpush1.msra.mxu0 %v294
      %371 = vmatprep.subr.mxu0 %v297
      %372 = vmatpush1.msra.mxu0 %v296
      %373 = vmatprep.subr.mxu0 %v299
      %374 = vmatpush1.msra.mxu0 %v298
      %375 = vmatprep.subr.mxu0 %v301
      %376 = vmatpush1.msra.mxu0 %v300
      %377 = vmatprep.subr.mxu0 %v303
      %378 = vmatpush1.msra.mxu0 %v302
      %379 = vmatprep.subr.mxu0 %v305
      %380 = vmatpush1.msra.mxu0 %v304
      %381 = vmatprep.subr.mxu0 %v307
      %382 = vmatpush1.msra.mxu0 %v306
      %383 = vmatprep.subr.mxu0 %v309
      %384 = vmatpush1.msra.mxu0 %v308
      %385 = vmatprep.subr.mxu0 %v311
      %386 = vmatpush1.msra.mxu0 %v310
      %387 = vmatprep.subr.mxu0 %v313
      %388 = vmatpush1.msra.mxu0 %v312
      %389 = vmatprep.subr.mxu0 %v315
      %390 = vmatpush1.msra.mxu0 %v314
      %391 = vmatprep.subr.mxu0 %v317
      %392 = vmatpush1.msra.mxu0 %v316
      %393 = vmatprep.subr.mxu0 %v319
      %394 = vmatpush1.msra.mxu0 %v318
      %395 = vmatprep.subr.mxu0 %v321
      %396 = vmatpush1.msra.mxu0 %v320
      %397 = vmatprep.subr.mxu0 %v323
      %398 = vmatpush1.msra.mxu0 %v322
      %399 = vmatprep.subr.mxu0 %v325
      %400 = vmatpush1.msra.mxu0 %v324
      %401 = vmatprep.subr.mxu0 %v327
      %402 = vmatpush1.msra.mxu0 %v326
      %403 = vmatprep.mubr.f32.mxu0 %v336
      %404 = vmatmul.mubr.f32.gmra.mrb[0].mxu0 %v335
      %v405 = vpop.f32.mrb[0].mxu0
      %v406 = vadd.f32 0.0, %v405
      %v407 = vpop.f32.mrb[0].mxu0
      %v408 = vadd.f32 0.0, %v407
      %409 = vdwg.mxu0
      %v412 = vunpack.c.l.s4 1983009808
      %v413 = vunpack.c.0.s8 %v412
      %v414 = vlaneseq
      %v415 = vshrl.u32 %v414, 7
      %v416 = vsub.s32 %v413, %v415
      %v417 = vrot.slane %v198, %v416
      %v418 = vcombine.high %v417, %v417
      %421 = vmatprep.subr.mxu0 %v200
      %422 = vmatpush1.msra.mxu0 %v199
      %423 = vmatprep.subr.mxu0 %v202
      %424 = vmatpush1.msra.mxu0 %v201
      %425 = vmatprep.subr.mxu0 %v204
      %426 = vmatpush1.msra.mxu0 %v203
      %427 = vmatprep.subr.mxu0 %v206
      %428 = vmatpush1.msra.mxu0 %v205
      %429 = vmatprep.subr.mxu0 %v208
      %430 = vmatpush1.msra.mxu0 %v207
      %431 = vmatprep.subr.mxu0 %v210
      %432 = vmatpush1.msra.mxu0 %v209
      %433 = vmatprep.subr.mxu0 %v212
      %434 = vmatpush1.msra.mxu0 %v211
      %435 = vmatprep.subr.mxu0 %v214
      %436 = vmatpush1.msra.mxu0 %v213
      %437 = vmatprep.subr.mxu0 %v216
      %438 = vmatpush1.msra.mxu0 %v215
      %439 = vmatprep.subr.mxu0 %v218
      %440 = vmatpush1.msra.mxu0 %v217
      %441 = vmatprep.subr.mxu0 %v220
      %442 = vmatpush1.msra.mxu0 %v219
      %443 = vmatprep.subr.mxu0 %v222
      %444 = vmatpush1.msra.mxu0 %v221
      %445 = vmatprep.subr.mxu0 %v224
      %446 = vmatpush1.msra.mxu0 %v223
      %447 = vmatprep.subr.mxu0 %v226
      %448 = vmatpush1.msra.mxu0 %v225
      %449 = vmatprep.subr.mxu0 %v228
      %450 = vmatpush1.msra.mxu0 %v227
      %451 = vmatprep.subr.mxu0 %v230
      %452 = vmatpush1.msra.mxu0 %v229
      %453 = vmatprep.subr.mxu0 %v232
      %454 = vmatpush1.msra.mxu0 %v231
      %455 = vmatprep.subr.mxu0 %v234
      %456 = vmatpush1.msra.mxu0 %v233
      %457 = vmatprep.subr.mxu0 %v236
      %458 = vmatpush1.msra.mxu0 %v235
      %459 = vmatprep.subr.mxu0 %v238
      %460 = vmatpush1.msra.mxu0 %v237
      %461 = vmatprep.subr.mxu0 %v240
      %462 = vmatpush1.msra.mxu0 %v239
      %463 = vmatprep.subr.mxu0 %v242
      %464 = vmatpush1.msra.mxu0 %v241
      %465 = vmatprep.subr.mxu0 %v244
      %466 = vmatpush1.msra.mxu0 %v243
      %467 = vmatprep.subr.mxu0 %v246
      %468 = vmatpush1.msra.mxu0 %v245
      %469 = vmatprep.subr.mxu0 %v248
      %470 = vmatpush1.msra.mxu0 %v247
      %471 = vmatprep.subr.mxu0 %v250
      %472 = vmatpush1.msra.mxu0 %v249
      %473 = vmatprep.subr.mxu0 %v252
      %474 = vmatpush1.msra.mxu0 %v251
      %475 = vmatprep.subr.mxu0 %v254
      %476 = vmatpush1.msra.mxu0 %v253
      %477 = vmatprep.subr.mxu0 %v256
      %478 = vmatpush1.msra.mxu0 %v255
      %479 = vmatprep.subr.mxu0 %v258
      %480 = vmatpush1.msra.mxu0 %v257
      %481 = vmatprep.subr.mxu0 %v260
      %482 = vmatpush1.msra.mxu0 %v259
      %483 = vmatprep.subr.mxu0 %v262
      %484 = vmatpush1.msra.mxu0 %v261
      %485 = vmatprep.mubr.f32.mxu0 %v418
      %486 = vmatmul.mubr.f32.gmra.mrb[0].mxu0 %v417
      %v487 = vpop.f32.mrb[0].mxu0
      %v488 = vadd.f32 %v406, %v487
      %v489 = vpop.f32.mrb[0].mxu0
      %v490 = vadd.f32 %v408, %v489
      %491 = vdwg.mxu0
      %v492 = vxor.u32 %v488, 2147483648
      %v493 = vxor.u32 %v490, 2147483648
      %v494 = vmul.f32 %v492, 1.442695
      %v495 = vpow.pop %v494
      %v496 = vmul.f32 %v493, 1.442695
      %v497 = vpow.pop %v496
      %v498 = vadd.f32 %v495, 1.0
      %v499 = vadd.f32 %v497, 1.0
      %v500 = vrcp.pop %v498
      %v501 = vmul.f32 1.0, %v500
      %v502 = vrcp.pop %v499
      %v503 = vmul.f32 1.0, %v502
      %v506 = vcombine.low %v501, %v503
      %v508 = vunpack.c.l.s4 1966171168
      %v509 = vunpack.c.0.s8 %v508
      %v510 = vlaneseq
      %v511 = vshrl.u32 %v510, 7
      %v512 = vsub.s32 %v509, %v511
      %v513 = vrot.slane %v506, %v512
      %v514 = vcombine.high %v513, %v513
      %v516 = vunpack.c.l.s4 1966171168
      %v517 = vunpack.c.0.s8 %v516
      %v518 = vlaneseq
      %v519 = vshrl.u32 %v518, 7
      %v520 = vsub.s32 %v517, %v519
      %v521 = vrot.slane %v513, %v520
      %v523 = vunpack.c.l.s4 1966171168
      %v524 = vunpack.c.0.s8 %v523
      %v525 = vlaneseq
      %v526 = vshrl.u32 %v525, 7
      %v527 = vsub.s32 %v524, %v526
      %v528 = vrot.slane %v514, %v527
      %v531 = vlaneseq
      %vm532 = vcmp.ge.s32.totalorder %v531, 0
      %vm533 = vcmp.lt.s32.totalorder %v531, 256
      %vm534 = vmand %vm532, %vm533
      %535 = vst.msk [vmem:[#allocation10] sm:$0x3] %vm534, %v521
      %536 = vst.msk [vmem:[#allocation10 + $0x2] sm:$0x3] %vm534, %v528
    $region33: #{tpu_custom_call.1} parent=1 // pred_fallthru
      _
    // Predicated region
    $region34: #{tpu_custom_call.1} parent=1 // pred_check
      _
    $region35: #{tpu_custom_call.1} parent=1 // pred_check_branch
      %538 = sbr.rel (0) target = $region37
    $region36: #{tpu_custom_call.1} parent=1 // pred_region
      %s540 = ssub.s32 64, 64
      %541 = vsyncadd [#allocation6], %s540
      %s542 = sshll.u32 [#allocation10], 4
      %s543 = int_to_ptr.vmem [resolvable:$true] %s542
      %548 = dma.vmem_to_hbm [thread:$0]  %s543, 64, %s3, [#allocation6], 32, 32, 2
    $region37: #{tpu_custom_call.1} parent=1 // pred_fallthru
      _
    // Predicated region
    $region38: #{tpu_custom_call.1} parent=1 // pred_check
      _
    $region39: #{tpu_custom_call.1} parent=1 // pred_check_branch
      %550 = sbr.rel (0) target = $region41
    $region40: #{tpu_custom_call.1} parent=1 // pred_region
      %551 = dma.done [#allocation6], 64
    $region41: #{tpu_custom_call.1} parent=1 // pred_fallthru
      _
    %552 = vsyncpa [#allocation5], 1
    %553 = vsyncpa [#allocation8], 1
    %554 = vsyncpa [#allocation6], 1

</llo_original>
